<compile_context>
chip_gen: v7x
topology: tpu7x:2x2x1
jax: 0.10.0
libtpu: 0.0.40
codegen_flags: <defaults>
</compile_context>

<pallas_src>
import functools

import jax
import jax.numpy as jnp
import numpy as np
from jax.experimental import pallas as pl
from jax.experimental.pallas import tpu as pltpu

_LANE = 128                 # TPU lane width
_DEFAULT_CLASS_TILE = 1024  # lanes per class tile (multiple of 128)
_DEFAULT_ROW_TILE = 256     # rows per tile (multiple of 32)


def _round_up(x, m):
    return ((x + m - 1) // m) * m


def _multihot_kernel(t_ref, o_ref, *, n_classes, smooth):
    """One grid step: a (row_tile, class_tile) slab of the multi-hot output."""
    j = pl.program_id(1)                      # class-tile index (innermost axis)
    tb, k_slots = t_ref.shape
    _, c_tile = o_ref.shape

    # class ids covered by this tile, broadcast over rows: (tb, c_tile)
    cls = jax.lax.broadcasted_iota(jnp.int32, (tb, c_tile), 1) + j * c_tile

    t = t_ref[...]                            # (tb, K) int32 indices

    # boolean OR over the K index slots (K is small & static -> unrolled)
    hot = cls == t[:, 0:1]
    for k in range(1, k_slots):
        hot = jnp.logical_or(hot, cls == t[:, k : k + 1])

    if smooth is None:
        res = jnp.where(hot, 1, 0)                              # int32 select
    else:
        on = np.float32(1.0 - smooth + smooth / n_classes)      # trace-time consts
        off = np.float32(smooth / n_classes)
        res = jnp.where(hot, on, off)                           # float32 select

    o_ref[...] = res.astype(o_ref.dtype)


def multi_hot(target, n_classes, dtype=jnp.bool_, smooth=None,
              *, class_tile=None, row_tile=None):
    """JAX/Pallas equivalent of MultiHot(n_classes, dtype, smooth)(target)."""
    target = jnp.asarray(target)
    # rank normalization like the torch module: scalar -> (1,1), 1-D -> (1,K)
    if target.ndim == 0:
        target = target.reshape(1, 1)
    elif target.ndim == 1:
        target = target.reshape(1, -1)
    target = target.astype(jnp.int32)
    B, K = target.shape

    if dtype is None:
        dtype = jnp.float32
    dtype = jnp.dtype(dtype)

    if smooth is not None:
        # torch semantics: python-float smoothing keeps float dtypes and
        # promotes bool/int results to float32.
        out_dtype = dtype if jnp.issubdtype(dtype, jnp.floating) else jnp.dtype(jnp.float32)
        kernel_dtype = out_dtype
    else:
        out_dtype = dtype
        # Mosaic bool memrefs are fragile; write 1-byte int8 in-kernel and do a
        # cheap byte-wise cast to bool outside (same width, 1/4 of f32 traffic).
        kernel_dtype = jnp.dtype(jnp.int8) if dtype == jnp.bool_ else dtype

    # ---- tiling -----------------------------------------------------------
    if n_classes < _LANE:
        class_tile = n_classes                       # full-dim lane block
    elif class_tile is None:
        # fat tiles, but keep >= 2 class tiles so both v7x TensorCores (and
        # megacore on v5e/v6e) get work.
        half = _round_up(_round_up(n_classes, _LANE) // 2, _LANE)
        class_tile = min(_DEFAULT_CLASS_TILE, max(_LANE, half))
    else:
        class_tile = min(_round_up(class_tile, _LANE), _round_up(n_classes, _LANE))

    if row_tile is None:
        row_tile = _DEFAULT_ROW_TILE
    row_tile = B if B <= row_tile else _round_up(row_tile, 8)

    grid = (pl.cdiv(B, row_tile), pl.cdiv(n_classes, class_tile))

    kernel = functools.partial(_multihot_kernel, n_classes=n_classes, smooth=smooth)

    # TODO(synk): for tiny B with very large n_classes a sublane-dense output
    # layout (folding class chunks into the sublane axis) would cut masked
    # stores further; skipped to keep the exact, slice-free (B, n_classes) layout.
    out = pl.pallas_call(
        kernel,
        out_shape=jax.ShapeDtypeStruct((B, n_classes), kernel_dtype),
        grid=grid,
        in_specs=[
            # index-table block; class axis is innermost, so this block is only
            # re-DMA'd when the row tile changes.
            pl.BlockSpec((row_tile, K), lambda i, j: (i, 0)),
        ],
        out_specs=pl.BlockSpec((row_tile, class_tile), lambda i, j: (i, j)),
        compiler_params=pltpu.CompilerParams(
            dimension_semantics=("parallel", "parallel"),
            vmem_limit_bytes=32 * 1024 * 1024,
        ),
    )(target)

    if out.dtype != out_dtype:
        out = out.astype(out_dtype)      # int8 -> bool only (1-byte pass)

    # torch's .squeeze(): drop all size-1 dims
    return jnp.squeeze(out)


if __name__ == "__main__":
    key = jax.random.PRNGKey(0)
    n_classes = 256
    B, K = 2, 4

    target = jax.random.randint(key, (B, K), 0, n_classes, dtype=jnp.int32)

    # default config: dtype=bool, smooth=None
    result = multi_hot(target, n_classes=n_classes, dtype=jnp.bool_, smooth=None)
    # smoothed variant (float output)
    result_s = multi_hot(target, n_classes=n_classes, smooth=0.1)
    # partial-tile coverage: n_classes not a multiple of 128, explicit small
    # row/class tiles so both grid axes have a masked final block
    key2 = jax.random.PRNGKey(1)
    B2, K2, n2 = 20, 3, 200
    target2 = jax.random.randint(key2, (B2, K2), 0, n2, dtype=jnp.int32)
    result2 = multi_hot(target2, n_classes=n2, row_tile=8, class_tile=128)
    # 1-D target -> squeezed single row
    result3 = multi_hot(target[0], n_classes=n_classes)

    jax.block_until_ready((result, result_s, result2, result3))

    # numpy references
    def ref_multihot(t, n):
        t = np.asarray(t)
        if t.ndim == 1:
            t = t[None, :]
        r = np.zeros((t.shape[0], n), dtype=bool)
        for i in range(t.shape[0]):
            for idx in t[i]:
                r[i, idx] = True
        return r

    ref = ref_multihot(target, n_classes)
    ref_s = (1.0 - 0.1) * ref.astype(np.float32) + 0.1 / n_classes
    ref2 = ref_multihot(target2, n2)
    ref3 = ref_multihot(target[0], n_classes)[0]

    assert result.shape == (B, n_classes) and result.dtype == jnp.bool_
    assert np.array_equal(np.asarray(result), ref)
    assert result_s.dtype == jnp.float32
    assert np.allclose(np.asarray(result_s), ref_s, atol=1e-6)
    assert result2.shape == (B2, n2) and result2.dtype == jnp.bool_
    assert np.array_equal(np.asarray(result2), ref2)
    assert result3.shape == (n_classes,) and np.array_equal(np.asarray(result3), ref3)

    print("KERNEL_OK")
</pallas_src>

<mosaic_0001>
module attributes {stable_mosaic.version = 11 : i64} {
  func.func @_multihot_kernel(%arg0: i32, %arg1: i32, %arg2: memref<2x4xi32, #tpu.memory_space<vmem>>, %arg3: memref<2x128xi8, #tpu.memory_space<vmem>>) attributes {dimension_semantics = [#tpu.dimension_semantics<parallel>, #tpu.dimension_semantics<parallel>], iteration_bounds = array<i64: 1, 2>, scalar_prefetch = 0 : i64, scratch_operands = 0 : i64, tpu.core_type = #tpu.core_type<tc>, window_params = [{transform_indices = @transform_0, window_bounds = array<i64: 2, 4>}, {transform_indices = @transform_1, window_bounds = array<i64: 2, 128>}]} {
    %0 = tpu.iota {dimensions = array<i32: 1>} : vector<2x128xi32>
    %c128_i32 = arith.constant 128 : i32
    %1 = arith.muli %arg1, %c128_i32 : i32
    %2 = vector.broadcast %1 : i32 to vector<2x128xi32>
    %3 = arith.addi %0, %2 : vector<2x128xi32>
    %c0 = arith.constant 0 : index
    %c0_0 = arith.constant 0 : index
    %4 = vector.load %arg2[%c0, %c0_0] : memref<2x4xi32, #tpu.memory_space<vmem>>, vector<2x4xi32>
    %5 = vector.extract_strided_slice %4 {offsets = [0, 0], sizes = [2, 1], strides = [1, 1]} : vector<2x4xi32> to vector<2x1xi32>
    %6 = vector.broadcast %5 : vector<2x1xi32> to vector<2x128xi32>
    %7 = arith.cmpi eq, %3, %6 : vector<2x128xi32>
    %8 = vector.extract_strided_slice %4 {offsets = [0, 1], sizes = [2, 1], strides = [1, 1]} : vector<2x4xi32> to vector<2x1xi32>
    %9 = vector.broadcast %8 : vector<2x1xi32> to vector<2x128xi32>
    %10 = arith.cmpi eq, %3, %9 : vector<2x128xi32>
    %11 = arith.ori %7, %10 : vector<2x128xi1>
    %12 = vector.extract_strided_slice %4 {offsets = [0, 2], sizes = [2, 1], strides = [1, 1]} : vector<2x4xi32> to vector<2x1xi32>
    %13 = vector.broadcast %12 : vector<2x1xi32> to vector<2x128xi32>
    %14 = arith.cmpi eq, %3, %13 : vector<2x128xi32>
    %15 = arith.ori %11, %14 : vector<2x128xi1>
    %16 = vector.extract_strided_slice %4 {offsets = [0, 3], sizes = [2, 1], strides = [1, 1]} : vector<2x4xi32> to vector<2x1xi32>
    %17 = vector.broadcast %16 : vector<2x1xi32> to vector<2x128xi32>
    %18 = arith.cmpi eq, %3, %17 : vector<2x128xi32>
    %19 = arith.ori %15, %18 : vector<2x128xi1>
    %c1_i32 = arith.constant 1 : i32
    %c0_i32 = arith.constant 0 : i32
    %20 = vector.broadcast %c1_i32 : i32 to vector<2x128xi32>
    %21 = vector.broadcast %c0_i32 : i32 to vector<2x128xi32>
    %22 = arith.select %19, %20, %21 : vector<2x128xi1>, vector<2x128xi32>
    %23 = arith.trunci %22 : vector<2x128xi32> to vector<2x128xi8>
    %c0_1 = arith.constant 0 : index
    %c0_2 = arith.constant 0 : index
    %24 = vector.load %arg3[%c0_1, %c0_2] : memref<2x128xi8, #tpu.memory_space<vmem>>, vector<2x128xi8>
    tpu.vector_store %arg3[%c0_1, %c0_2], %23 {strides = array<i32>} : memref<2x128xi8, #tpu.memory_space<vmem>>, vector<2x128xi8>,
    return
  }
  func.func @transform_0(%arg0: i32, %arg1: i32) -> (i32, i32) {
    %c0_i32 = arith.constant 0 : i32
    %c0_i32_0 = arith.constant 0 : i32
    return %arg0, %c0_i32 : i32, i32
  }
  func.func @transform_1(%arg0: i32, %arg1: i32) -> (i32, i32) {
    %c0_i32 = arith.constant 0 : i32
    return %arg0, %arg1 : i32, i32
  }
}

</mosaic_0001>

<llo_original>
// kernel: tpu_custom_call.1
$region0: #{tpu_custom_call.1}
  #allocation0 [shape = 'u32[]', space=smem, size = 0x4, offset = 0x4, fixed_abs, tag = 'smem constant byte address 0x4 - core index']
  #allocation1 [shape = 'u32[144,128]{1,0:T(1,128)}', space=vmem, size = 0x12000, scoped, tag = 'internal scratch']
  %s0 = inlined_call_operand.hbm [shape: s32[2,4], index: 0, kind: input, shape index: {}]
  %s1 = inlined_call_operand.hbm [shape: s8[2,256], index: 1, kind: output, shape index: {}]
  %s2 = sld [smem:[#allocation0]]
  $region41: #{tpu_custom_call.1} parent=0
    _
  %s4 = ssub.s32 1, %s2
  %s5 = scalar_select 0, %s4, %s2
  $region1: #{tpu_custom_call.1} parent=0
    #allocation2 [shape = 'u8[1024]{0}', space=vmem, size = 0x400, scoped, tag = 'input window, operand 0, single buffered']
    #allocation3 [shape = 's32[2]{0}', space=sflag, size = 0x8, scoped, tag = 'scoped memory for tpu_custom_call.1']
    #allocation4 [shape = 's32[2]{0}', space=sflag, size = 0x8, scoped, tag = 'scoped memory for tpu_custom_call.1']
    #allocation5 [shape = 'u8[1024]{0}', space=vmem, size = 0x400, scoped, tag = 'output window, operand 0']
    %6 = vsyncpa [#allocation3], 0
    %7 = vsyncpa [#allocation4], 0
    %s8 = scalar_lea.sflag [#allocation4], 1
    %9 = vsyncpa %s8, 0
    loop: start=0, step=1, limit=4
    $region2: #{tpu_custom_call.1} parent=1 // loop_pre_header
      _
    $region3: #{tpu_custom_call.1} parent=1 // loop_header
      %s11 = sphi 0, %s15
      %p12 = scmp.ge.s32.totalorder %s11, 4
      %s18 = sphi 0, %s30
      %s19 = sphi 0, %s26
      %s20 = sphi 0, %s18
      %s21 = sphi 0, %s19
      %s22 = sphi 0, %s20
      %s23 = sphi 0, %s21
      %s33 = sphi 0, %s35
      %s36 = sphi 0, %s33
      %s37 = sphi 0, %s36
      %s53 = sphi 0, %s37
      %s61 = sphi 0, %s63
      %s64 = sphi 0, %s61
      %s65 = sphi 0, %s64
      %s81 = sphi 0, %s65
    $region4: #{tpu_custom_call.1} parent=1 // loop_header_branch
      %14 = sbr.rel (%p12) target = $region8
    $region5: #{tpu_custom_call.1} parent=1 // loop_body
      %s16 = ssub.s32 %s11, 1
      %s17 = ssub.s32 %s11, 2
      %s24 = sadd.s32 1, %s19
      %p25 = scmp.ge.s32.totalorder %s24, 2
      %s26 = scalar_select %p25, 0, %s24
      %s27 = sadd.s32 1, %s18
      %s28 = scalar_select %p25, %s27, %s18
      %p29 = scmp.ge.s32.totalorder %s28, 1
      %s30 = scalar_select %p29, 0, %s28
      %s31 = ssub.s32 %s18, %s30
      %p32 = scmp.eq.s32.totalorder %s31, 0
      %s34 = sadd.s32 %s33, 1
      %s35 = scalar_select %p32, %s33, %s34
      %p38 = pneg %p32
      %p39 = scmp.eq.s32.totalorder %s11, 1
      %p40 = por %p38, %p39
      %p41 = scmp.ne.s32.totalorder %s33, %s36
      %p42 = scmp.eq.s32.totalorder %s11, 0
      %p43 = por %p41, %p42
      %p44 = scmp.ne.s32.totalorder %s33, %s36
      %p45 = scmp.eq.s32.totalorder %s16, 1
      %p46 = por %p44, %p45
      %p47 = scmp.ne.s32.totalorder %s36, %s37
      %p48 = scmp.eq.s32.totalorder %s16, 0
      %p49 = por %p47, %p48
      %p50 = scmp.ne.s32.totalorder %s36, %s37
      %p51 = scmp.eq.s32.totalorder %s17, 1
      %p52 = por %p50, %p51
      %p54 = scmp.ne.s32.totalorder %s37, %s53
      %p55 = scmp.eq.s32.totalorder %s17, 0
      %p56 = por %p54, %p55
      %s57 = ssub.s32 %s18, %s30
      %s58 = ssub.s32 %s19, %s26
      %s59 = sor.u32 %s57, %s58
      %p60 = scmp.eq.s32.totalorder %s59, 0
      %s62 = sadd.s32 %s61, 1
      %s63 = scalar_select %p60, %s61, %s62
      %p66 = pneg %p60
      %p67 = scmp.eq.s32.totalorder %s11, 1
      %p68 = por %p66, %p67
      %p69 = scmp.ne.s32.totalorder %s61, %s64
      %p70 = scmp.eq.s32.totalorder %s11, 0
      %p71 = por %p69, %p70
      %p72 = scmp.ne.s32.totalorder %s61, %s64
      %p73 = scmp.eq.s32.totalorder %s16, 1
      %p74 = por %p72, %p73
      %p75 = scmp.ne.s32.totalorder %s64, %s65
      %p76 = scmp.eq.s32.totalorder %s16, 0
      %p77 = por %p75, %p76
      %p78 = scmp.ne.s32.totalorder %s64, %s65
      %p79 = scmp.eq.s32.totalorder %s17, 1
      %p80 = por %p78, %p79
      %p82 = scmp.ne.s32.totalorder %s65, %s81
      %p83 = scmp.eq.s32.totalorder %s17, 0
      %p84 = por %p82, %p83
      %p85 = scmp.le.s32.totalorder 1, %s11
      %p86 = scmp.lt.s32.totalorder %s11, 3
      %p87 = pnand %p85, %p86
      %p88 = pneg %p87
      // Predicated region
      $region9: #{tpu_custom_call.1} parent=5 // pred_check
        _
      $region10: #{tpu_custom_call.1} parent=5 // pred_check_branch
        %90 = sbr.rel (%p87) target = $region12
      $region11: #{tpu_custom_call.1} parent=5 // pred_region
        %s91 = ssub.s32 %s11, 1
        // Predicated region
        $region13: #{tpu_custom_call.1} parent=11 // pred_check
          %p92 = pneg %p49
        $region14: #{tpu_custom_call.1} parent=11 // pred_check_branch
          %94 = sbr.rel (%p92) target = $region16
        $region15: #{tpu_custom_call.1} parent=11 // pred_region
          %s96 = ssub.s32 32, 32
          %97 = vsyncadd [#allocation3], %s96
          %s98 = smul.addr %s20, 32
          %s99 = scalar_lea.hbm %s0, %s98
          %s101 = sshll.u32 [#allocation2], 4
          %s102 = int_to_ptr.vmem [resolvable:$true] %s101
          %104 = dma.hbm_to_vmem [thread:$0]  %s99, 32, %s102, [#allocation3]
        $region16: #{tpu_custom_call.1} parent=11 // pred_fallthru
          _
      $region12: #{tpu_custom_call.1} parent=5 // pred_fallthru
        _
      %p105 = scmp.lt.s32.totalorder %s11, 2
      // Predicated region
      $region17: #{tpu_custom_call.1} parent=5 // pred_check
        %p106 = pneg %p105
      $region18: #{tpu_custom_call.1} parent=5 // pred_check_branch
        %108 = sbr.rel (%p106) target = $region20
      $region19: #{tpu_custom_call.1} parent=5 // pred_region
        _
      $region20: #{tpu_custom_call.1} parent=5 // pred_fallthru
        _
      %p109 = scmp.le.s32.totalorder 1, %s11
      %p110 = scmp.lt.s32.totalorder %s11, 3
      %p111 = pnand %p109, %p110
      %p112 = pneg %p111
      // Predicated region
      $region21: #{tpu_custom_call.1} parent=5 // pred_check
        _
      $region22: #{tpu_custom_call.1} parent=5 // pred_check_branch
        %114 = sbr.rel (%p111) target = $region24
      $region23: #{tpu_custom_call.1} parent=5 // pred_region
        %s115 = ssub.s32 %s11, 1
        // Predicated region
        $region25: #{tpu_custom_call.1} parent=23 // pred_check
          %p116 = pneg %p49
        $region26: #{tpu_custom_call.1} parent=23 // pred_check_branch
          %118 = sbr.rel (%p116) target = $region28
        $region27: #{tpu_custom_call.1} parent=23 // pred_region
          %119 = dma.done [#allocation3], 32
        $region28: #{tpu_custom_call.1} parent=23 // pred_fallthru
          _
        %p120 = pneg %p49
        %p121 = pneg %p46
        %p122 = pneg %p77
        %p123 = pneg %p74
        %s124 = sand.u32 %s64, 1
        %s125 = scalar_lea.sflag [#allocation4], %s124
        %s126 = sand.u32 %s64, 1
        %s127 = scalar_lea.vmem [#allocation5], %s126
        %v128 = vlaneseq
        %v129 = vand.u32 %v128, 127
        %s130 = smul.u32 %s21, 128
        %v131 = vstv %s130
        %v132 = vadd.s32 %v129, %v131
        %v133 = vld [vmem:[#allocation2] sm:$0x3]
        %134 = vset.pattern.permute.xlu0 0
        %135 = vperm.xlu0 %134, %v133
        %v136 = vpop.permute.xlu0 %135
        %vm137 = vcmp.eq.s32.totalorder %v132, %v136
        %138 = vset.pattern.permute.xlu0 1
        %139 = vperm.xlu0 %138, %v133
        %v140 = vpop.permute.xlu0 %139
        %vm141 = vcmp.eq.s32.totalorder %v132, %v140
        %vm142 = vmor %vm137, %vm141
        %143 = vset.pattern.permute.xlu0 2
        %144 = vperm.xlu0 %143, %v133
        %v145 = vpop.permute.xlu0 %144
        %vm146 = vcmp.eq.s32.totalorder %v132, %v145
        %vm147 = vmor %vm142, %vm146
        %148 = vset.pattern.permute.xlu0 3
        %149 = vperm.xlu0 %148, %v133
        %v150 = vpop.permute.xlu0 %149
        %vm151 = vcmp.eq.s32.totalorder %v132, %v150
        %vm152 = vmor %vm147, %vm151
        %v153 = vsel %vm152, 1, 0
        %v154 = vpack.c.b16 %v153, %v153
        %v155 = vpack.c.b8 %v154, %v154
        %vm156 = vcmask 1040384
        %vm157 = vsmask.f32 256
        %vm158 = vmand %vm156, %vm157
        %v159 = vld [vmem:[%s127] sm:$0x1]
        %v160 = vsel %vm158, %v155, %v159
        %161 = vst [vmem:[%s127] sm:$0x1] %v160
        %s162 = sand.u32 %s64, 1
        %s163 = scalar_lea.sflag [#allocation4], %s162
        %s164 = sand.u32 %s64, 1
        %s165 = scalar_lea.vmem [#allocation5], %s164
        // Predicated region
        $region29: #{tpu_custom_call.1} parent=23 // pred_check
          %p166 = pneg %p74
        $region30: #{tpu_custom_call.1} parent=23 // pred_check_branch
          %168 = sbr.rel (%p166) target = $region32
        $region31: #{tpu_custom_call.1} parent=23 // pred_region
          %s170 = ssub.s32 16, 16
          %171 = vsyncadd %s163, %s170
          %s172 = smul.addr %s20, 2
          %s173 = sadd.s32 %s21, %s172
          %s174 = smul.addr %s173, 16
          %s175 = scalar_lea.hbm %s1, %s174
          %s177 = sshll.u32 %s165, 4
          %s178 = int_to_ptr.vmem [resolvable:$true] %s177
          %180 = dma.vmem_to_hbm [thread:$0]  %s178, 16, %s175, %s163
        $region32: #{tpu_custom_call.1} parent=23 // pred_fallthru
          _
      $region24: #{tpu_custom_call.1} parent=5 // pred_fallthru
        _
      %p181 = scmp.le.s32.totalorder 2, %s11
      // Predicated region
      $region33: #{tpu_custom_call.1} parent=5 // pred_check
        %p182 = pneg %p181
      $region34: #{tpu_custom_call.1} parent=5 // pred_check_branch
        %184 = sbr.rel (%p182) target = $region36
      $region35: #{tpu_custom_call.1} parent=5 // pred_region
        %s185 = ssub.s32 %s11, 2
        // Predicated region
        $region37: #{tpu_custom_call.1} parent=35 // pred_check
          %p186 = pneg %p80
        $region38: #{tpu_custom_call.1} parent=35 // pred_check_branch
          %188 = sbr.rel (%p186) target = $region40
        $region39: #{tpu_custom_call.1} parent=35 // pred_region
          %s189 = sand.u32 %s65, 1
          %s190 = scalar_lea.sflag [#allocation4], %s189
          %s191 = sand.u32 %s65, 1
          %s192 = scalar_lea.vmem [#allocation5], %s191
          %193 = dma.done %s190, 16
        $region40: #{tpu_custom_call.1} parent=35 // pred_fallthru
          _
      $region36: #{tpu_custom_call.1} parent=5 // pred_fallthru
        _
    $region6: #{tpu_custom_call.1} parent=1 // loop_footer
      %s15 = sadd.s32 1, %s11
    $region7: #{tpu_custom_call.1} parent=1 // loop_footer_branch
      %10 = sbr.rel target = $region3
    $region8: #{tpu_custom_call.1} parent=1 // loop_exit
      _
    %194 = vsyncpa [#allocation3], 1
    %s195 = scalar_lea.sflag [#allocation3], 1
    %196 = vsyncpa %s195, 1
    %197 = vsyncpa [#allocation4], 1
    %s198 = scalar_lea.sflag [#allocation4], 1
    %199 = vsyncpa %s198, 1

</llo_original>
